<compile_context>
chip_gen: v7x
topology: tpu7x:2x2x1
jax: 0.10.0
libtpu: 0.0.40
codegen_flags: <defaults>
</compile_context>

<pallas_src>
import jax
import jax.numpy as jnp
from jax.experimental import pallas as pl
from jax.experimental.pallas import tpu as pltpu


def _round_up(x, m):
    return ((x + m - 1) // m) * m


def _vmem_capacity_bytes(default=64 << 20):
    try:
        return int(pltpu.get_tpu_info().vmem_capacity_bytes)
    except Exception:
        return default


# Kernel block layout: x slab of shape (TB, C, HW) — channels on the sublane
# axis, flattened spatial on the lane axis (full-dim block, no HBM padding).
def scse_kernel(x_ref, wc_ref, bc_ref, ws_ref, bs_ref, o_ref):
    x = x_ref[...]                                                  # (TB, C, HW), native dtype

    # cSE: per-(image, channel) gate. Lane (HW) reduction on VPU/XLU instead
    # of an N=1 MXU matmul; f32 accumulation via the cast inside the reduce.
    cse = jnp.sum(x.astype(jnp.float32) * wc_ref[...][None, :, :],
                  axis=2, keepdims=True)                            # (TB, C, 1)
    gate_c = jax.nn.sigmoid(cse + bc_ref[...][None, :, :])          # (TB, C, 1) f32

    # sSE: per-(image, pixel) gate. Sublane (C) reduction, also off the MXU.
    sse = jnp.sum(x.astype(jnp.float32) * ws_ref[...][None, :, :],
                  axis=1, keepdims=True)                            # (TB, 1, HW)
    gate_s = jax.nn.sigmoid(sse + bs_ref[...][None, :, :])          # (TB, 1, HW) f32

    # x*gate_c + x*gate_s == x*(gate_c + gate_s): single fused store pass.
    # Gate sum stays in f32; one cast for the native-dtype multiply.
    gate = gate_c + gate_s
    o_ref[...] = (x * gate.astype(x.dtype)).astype(o_ref.dtype)


def scse_block(x, w_cse, bias_c, w_sse, bias_s, *,
               target_block_bytes=None, vmem_limit_bytes=None):
    """scSEBlock.forward (eval mode).

    x      : (B, C, H, W)
    w_cse  : (H*W,)  cSE.attention_fc.weight row
    bias_c : (C,)    cSE.bias
    w_sse  : (C,)    sSE.attention_fc.weight row
    bias_s : (H*W,)  sSE.bias flattened
    """
    b, c, h, w = x.shape
    hw = h * w
    in_bytes = jnp.dtype(x.dtype).itemsize

    # Per-generation VMEM sizing (v5e/v6e: 128 MiB physical; v7x: 64 MiB).
    if target_block_bytes is None or vmem_limit_bytes is None:
        cap = _vmem_capacity_bytes()
        if target_block_bytes is None:
            target_block_bytes = (8 << 20) if cap >= (96 << 20) else (4 << 20)
        if vmem_limit_bytes is None:
            vmem_limit_bytes = int(min(cap - (16 << 20), 64 << 20))

    wc = jnp.reshape(w_cse, (1, hw)).astype(jnp.float32)   # lane-dense
    bc = jnp.reshape(bias_c, (c, 1)).astype(jnp.float32)
    ws = jnp.reshape(w_sse, (c, 1)).astype(jnp.float32)
    bs = jnp.reshape(bias_s, (1, hw)).astype(jnp.float32)  # lane-dense

    xf = x.reshape(b, c, hw)   # metadata-only reshape, no HBM pass

    # VMEM footprint per image: double-buffered input + output slabs (native
    # dtype) plus the in-kernel f32 gate slab, at VMEM-padded extents.
    c_sub = _round_up(c, 8)
    hw_lanes = _round_up(hw, 128)
    per_image = c_sub * hw_lanes * (2 * in_bytes + 2 * in_bytes + 4)
    tb = int(max(1, min(b, target_block_bytes // max(per_image, 1))))
    # Keep >=2 grid steps so the "parallel" batch axis shards across both
    # TensorCores on v7x (per-step overhead ~0.35 us, negligible on 1-TC chips).
    if b >= 2:
        tb = min(tb, pl.cdiv(b, 2))
    grid = (pl.cdiv(b, tb),)   # partial tail block instead of jnp.pad + slice

    cost = pl.CostEstimate(
        flops=6 * b * c * hw,
        transcendentals=b * (c + hw),
        bytes_accessed=2 * b * c * hw * in_bytes,
    )

    out = pl.pallas_call(
        scse_kernel,
        out_shape=jax.ShapeDtypeStruct((b, c, hw), x.dtype),
        grid=grid,
        in_specs=[
            pl.BlockSpec((tb, c, hw), lambda i: (i, 0, 0)),   # x slab
            pl.BlockSpec((1, hw), lambda i: (0, 0)),          # cSE weight (lane-dense)
            pl.BlockSpec((c, 1), lambda i: (0, 0)),           # cSE bias
            pl.BlockSpec((c, 1), lambda i: (0, 0)),           # sSE weight
            pl.BlockSpec((1, hw), lambda i: (0, 0)),          # sSE bias (lane-dense)
        ],
        out_specs=pl.BlockSpec((tb, c, hw), lambda i: (i, 0, 0)),
        compiler_params=pltpu.CompilerParams(
            dimension_semantics=("parallel",),
            vmem_limit_bytes=int(vmem_limit_bytes),
        ),
        cost_estimate=cost,
    )(xf, wc, bc, ws, bs)
    return out.reshape(b, c, h, w)


def reference(x, w_cse, bias_c, w_sse, bias_s):
    """Plain-JAX mirror of scSEBlock.forward (eval mode)."""
    b, c, h, w = x.shape
    hw = h * w
    xf = x.reshape(b, c, hw).astype(jnp.float32)
    # cSE
    wc = jnp.reshape(w_cse, (hw, 1))
    gate_c = jax.nn.sigmoid(xf @ wc + jnp.reshape(bias_c, (1, c, 1)))      # (b, c, 1)
    x1 = xf * gate_c
    # sSE
    ws = jnp.reshape(w_sse, (c,))
    logit_s = jnp.einsum("bcp,c->bp", xf, ws)[:, None, :]                  # (b, 1, hw)
    gate_s = jax.nn.sigmoid(logit_s + jnp.reshape(bias_s, (1, 1, hw)))
    x2 = xf * gate_s
    return (x1 + x2).reshape(b, c, h, w).astype(x.dtype)


if __name__ == "__main__":
    B, C, H, W = 2, 4, 16, 16
    HW = H * W
    key = jax.random.PRNGKey(0)
    kx, kwc, kws = jax.random.split(key, 3)

    x = jax.random.normal(kx, (B, C, H, W), dtype=jnp.float32)

    # Deterministic synthetic parameters (shapes match the PyTorch module):
    #   cSE.attention_fc.weight : (1, H*W) -> row vector (H*W,)
    #   cSE.bias                : (1, C, 1) -> (C,), zeros
    #   sSE.attention_fc.weight : (1, C)   (orthogonal init == unit-norm row)
    #   sSE.bias                : (1, H, W, 1) -> (H*W,), zeros
    w_cse = jax.random.uniform(kwc, (HW,), jnp.float32,
                               minval=-1.0 / jnp.sqrt(HW),
                               maxval=1.0 / jnp.sqrt(HW))
    bias_c = jnp.zeros((C,), jnp.float32)
    w_sse_raw = jax.random.normal(kws, (C,), jnp.float32)
    w_sse = w_sse_raw / jnp.linalg.norm(w_sse_raw)
    bias_s = jnp.zeros((HW,), jnp.float32)

    out = scse_block(x, w_cse, bias_c, w_sse, bias_s)
    out = jax.block_until_ready(out)

    ref = reference(x, w_cse, bias_c, w_sse, bias_s)
    assert out.shape == (B, C, H, W)
    assert jnp.allclose(out, ref, atol=1e-5, rtol=1e-5), "mismatch vs reference"

    print("KERNEL_OK")
</pallas_src>

<mosaic_0001>
module attributes {stable_mosaic.version = 11 : i64} {
  func.func @scse_kernel(%arg0: i32, %arg1: memref<1x4x256xf32, #tpu.memory_space<vmem>>, %arg2: memref<1x256xf32, #tpu.memory_space<vmem>>, %arg3: memref<4x1xf32, #tpu.memory_space<vmem>>, %arg4: memref<4x1xf32, #tpu.memory_space<vmem>>, %arg5: memref<1x256xf32, #tpu.memory_space<vmem>>, %arg6: memref<1x4x256xf32, #tpu.memory_space<vmem>>) attributes {dimension_semantics = [#tpu.dimension_semantics<parallel>], iteration_bounds = array<i64: 2>, scalar_prefetch = 0 : i64, scratch_operands = 0 : i64, tpu.core_type = #tpu.core_type<tc>, window_params = [{transform_indices = @transform_0, window_bounds = array<i64: 1, 4, 256>}, {pipeline_mode = #tpu.pipeline_mode<synchronous>, transform_indices = @transform_1, window_bounds = array<i64: 1, 256>}, {pipeline_mode = #tpu.pipeline_mode<synchronous>, transform_indices = @transform_2, window_bounds = array<i64: 4, 1>}, {pipeline_mode = #tpu.pipeline_mode<synchronous>, transform_indices = @transform_3, window_bounds = array<i64: 4, 1>}, {pipeline_mode = #tpu.pipeline_mode<synchronous>, transform_indices = @transform_4, window_bounds = array<i64: 1, 256>}, {transform_indices = @transform_5, window_bounds = array<i64: 1, 4, 256>}]} {
    %c0 = arith.constant 0 : index
    %c0_0 = arith.constant 0 : index
    %c0_1 = arith.constant 0 : index
    %0 = vector.load %arg1[%c0, %c0_0, %c0_1] : memref<1x4x256xf32, #tpu.memory_space<vmem>>, vector<1x4x256xf32>
    %c0_2 = arith.constant 0 : index
    %c0_3 = arith.constant 0 : index
    %1 = vector.load %arg2[%c0_2, %c0_3] : memref<1x256xf32, #tpu.memory_space<vmem>>, vector<1x256xf32>
    %2 = vector.shape_cast %1 : vector<1x256xf32> to vector<1x1x256xf32>
    %3 = vector.broadcast %2 : vector<1x1x256xf32> to vector<1x4x256xf32>
    %4 = arith.mulf %0, %3 : vector<1x4x256xf32>
    %cst = arith.constant dense<0.000000e+00> : vector<1x4xf32>
    %5 = vector.multi_reduction <add>, %4, %cst [2] : vector<1x4x256xf32> to vector<1x4xf32>
    %6 = vector.shape_cast %5 : vector<1x4xf32> to vector<1x4x1xf32>
    %c0_4 = arith.constant 0 : index
    %c0_5 = arith.constant 0 : index
    %7 = vector.load %arg3[%c0_4, %c0_5] : memref<4x1xf32, #tpu.memory_space<vmem>>, vector<4x1xf32>
    %8 = vector.shape_cast %7 : vector<4x1xf32> to vector<1x4x1xf32>
    %9 = arith.addf %6, %8 : vector<1x4x1xf32>
    %10 = arith.negf %9 : vector<1x4x1xf32>
    %11 = math.exp %10 : vector<1x4x1xf32>
    %cst_6 = arith.constant 1.000000e+00 : f32
    %12 = vector.broadcast %cst_6 : f32 to vector<1x4x1xf32>
    %13 = arith.addf %12, %11 : vector<1x4x1xf32>
    %14 = arith.divf %12, %13 : vector<1x4x1xf32>
    %c0_7 = arith.constant 0 : index
    %c0_8 = arith.constant 0 : index
    %15 = vector.load %arg4[%c0_7, %c0_8] : memref<4x1xf32, #tpu.memory_space<vmem>>, vector<4x1xf32>
    %16 = vector.shape_cast %15 : vector<4x1xf32> to vector<1x4x1xf32>
    %17 = vector.broadcast %16 : vector<1x4x1xf32> to vector<1x4x256xf32>
    %18 = arith.mulf %0, %17 : vector<1x4x256xf32>
    %cst_9 = arith.constant dense<0.000000e+00> : vector<1x256xf32>
    %19 = vector.multi_reduction <add>, %18, %cst_9 [1] : vector<1x4x256xf32> to vector<1x256xf32>
    %20 = vector.shape_cast %19 : vector<1x256xf32> to vector<1x1x256xf32>
    %c0_10 = arith.constant 0 : index
    %c0_11 = arith.constant 0 : index
    %21 = vector.load %arg5[%c0_10, %c0_11] : memref<1x256xf32, #tpu.memory_space<vmem>>, vector<1x256xf32>
    %22 = vector.shape_cast %21 : vector<1x256xf32> to vector<1x1x256xf32>
    %23 = arith.addf %20, %22 : vector<1x1x256xf32>
    %24 = arith.negf %23 : vector<1x1x256xf32>
    %25 = math.exp %24 : vector<1x1x256xf32>
    %cst_12 = arith.constant 1.000000e+00 : f32
    %26 = vector.broadcast %cst_12 : f32 to vector<1x1x256xf32>
    %27 = arith.addf %26, %25 : vector<1x1x256xf32>
    %28 = arith.divf %26, %27 : vector<1x1x256xf32>
    %29 = vector.broadcast %14 : vector<1x4x1xf32> to vector<1x4x256xf32>
    %30 = vector.broadcast %28 : vector<1x1x256xf32> to vector<1x4x256xf32>
    %31 = arith.addf %29, %30 : vector<1x4x256xf32>
    %32 = arith.mulf %0, %31 : vector<1x4x256xf32>
    %c0_13 = arith.constant 0 : index
    %c0_14 = arith.constant 0 : index
    %c0_15 = arith.constant 0 : index
    %33 = vector.load %arg6[%c0_13, %c0_14, %c0_15] : memref<1x4x256xf32, #tpu.memory_space<vmem>>, vector<1x4x256xf32>
    tpu.vector_store %arg6[%c0_13, %c0_14, %c0_15], %32 {strides = array<i32>} : memref<1x4x256xf32, #tpu.memory_space<vmem>>, vector<1x4x256xf32>,
    return
  }
  func.func @transform_0(%arg0: i32) -> (i32, i32, i32) {
    %c0_i32 = arith.constant 0 : i32
    %c0_i32_0 = arith.constant 0 : i32
    %c0_i32_1 = arith.constant 0 : i32
    return %arg0, %c0_i32, %c0_i32_0 : i32, i32, i32
  }
  func.func @transform_1(%arg0: i32) -> (i32, i32) {
    %c0_i32 = arith.constant 0 : i32
    %c0_i32_0 = arith.constant 0 : i32
    %c0_i32_1 = arith.constant 0 : i32
    return %c0_i32, %c0_i32_0 : i32, i32
  }
  func.func @transform_2(%arg0: i32) -> (i32, i32) {
    %c0_i32 = arith.constant 0 : i32
    %c0_i32_0 = arith.constant 0 : i32
    %c0_i32_1 = arith.constant 0 : i32
    return %c0_i32, %c0_i32_0 : i32, i32
  }
  func.func @transform_3(%arg0: i32) -> (i32, i32) {
    %c0_i32 = arith.constant 0 : i32
    %c0_i32_0 = arith.constant 0 : i32
    %c0_i32_1 = arith.constant 0 : i32
    return %c0_i32, %c0_i32_0 : i32, i32
  }
  func.func @transform_4(%arg0: i32) -> (i32, i32) {
    %c0_i32 = arith.constant 0 : i32
    %c0_i32_0 = arith.constant 0 : i32
    %c0_i32_1 = arith.constant 0 : i32
    return %c0_i32, %c0_i32_0 : i32, i32
  }
  func.func @transform_5(%arg0: i32) -> (i32, i32, i32) {
    %c0_i32 = arith.constant 0 : i32
    %c0_i32_0 = arith.constant 0 : i32
    %c0_i32_1 = arith.constant 0 : i32
    return %arg0, %c0_i32, %c0_i32_0 : i32, i32, i32
  }
}

</mosaic_0001>

<llo_original>
// kernel: tpu_custom_call.1
$region0: #{tpu_custom_call.1}
  #allocation0 [shape = 'u32[]', space=smem, size = 0x4, offset = 0x4, fixed_abs, tag = 'smem constant byte address 0x4 - core index']
  #allocation1 [shape = 'u32[144,128]{1,0:T(1,128)}', space=vmem, size = 0x12000, scoped, tag = 'internal scratch']
  %s0 = inlined_call_operand.hbm [shape: f32[2,4,256], index: 0, kind: input, shape index: {}]
  %s1 = inlined_call_operand.vmem [shape: f32[1,256], index: 1, kind: input, shape index: {}]
  %s2 = inlined_call_operand.vmem [shape: f32[4,1], index: 2, kind: input, shape index: {}]
  %s3 = inlined_call_operand.vmem [shape: f32[4,1], index: 3, kind: input, shape index: {}]
  %s4 = inlined_call_operand.vmem [shape: f32[1,256], index: 4, kind: input, shape index: {}]
  %s5 = inlined_call_operand.hbm [shape: f32[2,4,256], index: 5, kind: output, shape index: {}]
  %s6 = sld [smem:[#allocation0]]
  $region57: #{tpu_custom_call.1} parent=0
    _
  %s8 = ssub.s32 1, %s6
  %s9 = scalar_select 0, %s8, %s6
  $region1: #{tpu_custom_call.1} parent=0
    #allocation2 [shape = 'u8[8192]{0}', space=vmem, size = 0x2000, scoped, tag = 'input window, operand 0']
    #allocation3 [shape = 's32[2]{0}', space=sflag, size = 0x8, scoped, tag = 'scoped memory for tpu_custom_call.1']
    #allocation4 [shape = 's32[2]{0}', space=sflag, size = 0x8, scoped, tag = 'scoped memory for tpu_custom_call.1']
    #allocation5 [shape = 'u8[8192]{0}', space=vmem, size = 0x2000, scoped, tag = 'output window, operand 0']
    %10 = vsyncpa [#allocation3], 0
    %s11 = scalar_lea.sflag [#allocation3], 1
    %12 = vsyncpa %s11, 0
    %13 = vsyncpa [#allocation4], 0
    %s14 = scalar_lea.sflag [#allocation4], 1
    %15 = vsyncpa %s14, 0
    loop: start=0, step=1, limit=4
    $region2: #{tpu_custom_call.1} parent=1 // loop_pre_header
      _
    $region3: #{tpu_custom_call.1} parent=1 // loop_header
      %s17 = sphi 0, %s21
      %p18 = scmp.ge.s32.totalorder %s17, 4
      %s27 = sphi 0, %s29
      %s30 = sphi 0, %s27
      %s31 = sphi 0, %s30
      %s47 = sphi 0, %s31
      %s51 = sphi 0, %s51
      %s53 = sphi 0, %s51
      %s54 = sphi 0, %s53
      %s68 = sphi 0, %s54
      %s72 = sphi 0, %s72
      %s74 = sphi 0, %s72
      %s75 = sphi 0, %s74
      %s89 = sphi 0, %s75
      %s93 = sphi 0, %s93
      %s95 = sphi 0, %s93
      %s96 = sphi 0, %s95
      %s110 = sphi 0, %s96
      %s114 = sphi 0, %s114
      %s116 = sphi 0, %s114
      %s117 = sphi 0, %s116
      %s131 = sphi 0, %s117
      %s137 = sphi 0, %s139
      %s140 = sphi 0, %s137
      %s141 = sphi 0, %s140
      %s157 = sphi 0, %s141
    $region4: #{tpu_custom_call.1} parent=1 // loop_header_branch
      %20 = sbr.rel (%p18) target = $region8
    $region5: #{tpu_custom_call.1} parent=1 // loop_body
      %s22 = ssub.s32 %s17, 1
      %s23 = ssub.s32 %s17, 2
      %s24 = sadd.s32 %s17, 1
      %s25 = ssub.s32 %s17, %s24
      %p26 = scmp.eq.s32.totalorder %s25, 0
      %s28 = sadd.s32 %s27, 1
      %s29 = scalar_select %p26, %s27, %s28
      %p32 = pneg %p26
      %p33 = scmp.eq.s32.totalorder %s17, 1
      %p34 = por %p32, %p33
      %p35 = scmp.ne.s32.totalorder %s27, %s30
      %p36 = scmp.eq.s32.totalorder %s17, 0
      %p37 = por %p35, %p36
      %p38 = scmp.ne.s32.totalorder %s27, %s30
      %p39 = scmp.eq.s32.totalorder %s22, 1
      %p40 = por %p38, %p39
      %p41 = scmp.ne.s32.totalorder %s30, %s31
      %p42 = scmp.eq.s32.totalorder %s22, 0
      %p43 = por %p41, %p42
      %p44 = scmp.ne.s32.totalorder %s30, %s31
      %p45 = scmp.eq.s32.totalorder %s23, 1
      %p46 = por %p44, %p45
      %p48 = scmp.ne.s32.totalorder %s31, %s47
      %p49 = scmp.eq.s32.totalorder %s23, 0
      %p50 = por %p48, %p49
      %s52 = sadd.s32 %s51, 1
      %p55 = scmp.eq.s32.totalorder %s17, 1
      %p56 = scmp.ne.s32.totalorder %s51, %s53
      %p57 = scmp.eq.s32.totalorder %s17, 0
      %p58 = por %p56, %p57
      %p59 = scmp.ne.s32.totalorder %s51, %s53
      %p60 = scmp.eq.s32.totalorder %s22, 1
      %p61 = por %p59, %p60
      %p62 = scmp.ne.s32.totalorder %s53, %s54
      %p63 = scmp.eq.s32.totalorder %s22, 0
      %p64 = por %p62, %p63
      %p65 = scmp.ne.s32.totalorder %s53, %s54
      %p66 = scmp.eq.s32.totalorder %s23, 1
      %p67 = por %p65, %p66
      %p69 = scmp.ne.s32.totalorder %s54, %s68
      %p70 = scmp.eq.s32.totalorder %s23, 0
      %p71 = por %p69, %p70
      %s73 = sadd.s32 %s72, 1
      %p76 = scmp.eq.s32.totalorder %s17, 1
      %p77 = scmp.ne.s32.totalorder %s72, %s74
      %p78 = scmp.eq.s32.totalorder %s17, 0
      %p79 = por %p77, %p78
      %p80 = scmp.ne.s32.totalorder %s72, %s74
      %p81 = scmp.eq.s32.totalorder %s22, 1
      %p82 = por %p80, %p81
      %p83 = scmp.ne.s32.totalorder %s74, %s75
      %p84 = scmp.eq.s32.totalorder %s22, 0
      %p85 = por %p83, %p84
      %p86 = scmp.ne.s32.totalorder %s74, %s75
      %p87 = scmp.eq.s32.totalorder %s23, 1
      %p88 = por %p86, %p87
      %p90 = scmp.ne.s32.totalorder %s75, %s89
      %p91 = scmp.eq.s32.totalorder %s23, 0
      %p92 = por %p90, %p91
      %s94 = sadd.s32 %s93, 1
      %p97 = scmp.eq.s32.totalorder %s17, 1
      %p98 = scmp.ne.s32.totalorder %s93, %s95
      %p99 = scmp.eq.s32.totalorder %s17, 0
      %p100 = por %p98, %p99
      %p101 = scmp.ne.s32.totalorder %s93, %s95
      %p102 = scmp.eq.s32.totalorder %s22, 1
      %p103 = por %p101, %p102
      %p104 = scmp.ne.s32.totalorder %s95, %s96
      %p105 = scmp.eq.s32.totalorder %s22, 0
      %p106 = por %p104, %p105
      %p107 = scmp.ne.s32.totalorder %s95, %s96
      %p108 = scmp.eq.s32.totalorder %s23, 1
      %p109 = por %p107, %p108
      %p111 = scmp.ne.s32.totalorder %s96, %s110
      %p112 = scmp.eq.s32.totalorder %s23, 0
      %p113 = por %p111, %p112
      %s115 = sadd.s32 %s114, 1
      %p118 = scmp.eq.s32.totalorder %s17, 1
      %p119 = scmp.ne.s32.totalorder %s114, %s116
      %p120 = scmp.eq.s32.totalorder %s17, 0
      %p121 = por %p119, %p120
      %p122 = scmp.ne.s32.totalorder %s114, %s116
      %p123 = scmp.eq.s32.totalorder %s22, 1
      %p124 = por %p122, %p123
      %p125 = scmp.ne.s32.totalorder %s116, %s117
      %p126 = scmp.eq.s32.totalorder %s22, 0
      %p127 = por %p125, %p126
      %p128 = scmp.ne.s32.totalorder %s116, %s117
      %p129 = scmp.eq.s32.totalorder %s23, 1
      %p130 = por %p128, %p129
      %p132 = scmp.ne.s32.totalorder %s117, %s131
      %p133 = scmp.eq.s32.totalorder %s23, 0
      %p134 = por %p132, %p133
      %s135 = ssub.s32 %s17, %s24
      %p136 = scmp.eq.s32.totalorder %s135, 0
      %s138 = sadd.s32 %s137, 1
      %s139 = scalar_select %p136, %s137, %s138
      %p142 = pneg %p136
      %p143 = scmp.eq.s32.totalorder %s17, 1
      %p144 = por %p142, %p143
      %p145 = scmp.ne.s32.totalorder %s137, %s140
      %p146 = scmp.eq.s32.totalorder %s17, 0
      %p147 = por %p145, %p146
      %p148 = scmp.ne.s32.totalorder %s137, %s140
      %p149 = scmp.eq.s32.totalorder %s22, 1
      %p150 = por %p148, %p149
      %p151 = scmp.ne.s32.totalorder %s140, %s141
      %p152 = scmp.eq.s32.totalorder %s22, 0
      %p153 = por %p151, %p152
      %p154 = scmp.ne.s32.totalorder %s140, %s141
      %p155 = scmp.eq.s32.totalorder %s23, 1
      %p156 = por %p154, %p155
      %p158 = scmp.ne.s32.totalorder %s141, %s157
      %p159 = scmp.eq.s32.totalorder %s23, 0
      %p160 = por %p158, %p159
      %p161 = scmp.le.s32.totalorder 1, %s17
      %p162 = scmp.lt.s32.totalorder %s17, 3
      %p163 = pnand %p161, %p162
      %p164 = pneg %p163
      // Predicated region
      $region9: #{tpu_custom_call.1} parent=5 // pred_check
        _
      $region10: #{tpu_custom_call.1} parent=5 // pred_check_branch
        %166 = sbr.rel (%p163) target = $region12
      $region11: #{tpu_custom_call.1} parent=5 // pred_region
        %s167 = ssub.s32 %s17, 1
        // Predicated region
        $region13: #{tpu_custom_call.1} parent=11 // pred_check
          %p168 = pneg %p64
        $region14: #{tpu_custom_call.1} parent=11 // pred_check_branch
          %170 = sbr.rel (%p168) target = $region16
        $region15: #{tpu_custom_call.1} parent=11 // pred_region
          _
        $region16: #{tpu_custom_call.1} parent=11 // pred_fallthru
          _
        // Predicated region
        $region17: #{tpu_custom_call.1} parent=11 // pred_check
          %p171 = pneg %p85
        $region18: #{tpu_custom_call.1} parent=11 // pred_check_branch
          %173 = sbr.rel (%p171) target = $region20
        $region19: #{tpu_custom_call.1} parent=11 // pred_region
          _
        $region20: #{tpu_custom_call.1} parent=11 // pred_fallthru
          _
        // Predicated region
        $region21: #{tpu_custom_call.1} parent=11 // pred_check
          %p174 = pneg %p106
        $region22: #{tpu_custom_call.1} parent=11 // pred_check_branch
          %176 = sbr.rel (%p174) target = $region24
        $region23: #{tpu_custom_call.1} parent=11 // pred_region
          _
        $region24: #{tpu_custom_call.1} parent=11 // pred_fallthru
          _
        // Predicated region
        $region25: #{tpu_custom_call.1} parent=11 // pred_check
          %p177 = pneg %p127
        $region26: #{tpu_custom_call.1} parent=11 // pred_check_branch
          %179 = sbr.rel (%p177) target = $region28
        $region27: #{tpu_custom_call.1} parent=11 // pred_region
          _
        $region28: #{tpu_custom_call.1} parent=11 // pred_fallthru
          _
      $region12: #{tpu_custom_call.1} parent=5 // pred_fallthru
        _
      %p180 = scmp.lt.s32.totalorder %s17, 2
      // Predicated region
      $region29: #{tpu_custom_call.1} parent=5 // pred_check
        %p181 = pneg %p180
      $region30: #{tpu_custom_call.1} parent=5 // pred_check_branch
        %183 = sbr.rel (%p181) target = $region32
      $region31: #{tpu_custom_call.1} parent=5 // pred_region
        // Predicated region
        $region33: #{tpu_custom_call.1} parent=31 // pred_check
          %p184 = pneg %p37
        $region34: #{tpu_custom_call.1} parent=31 // pred_check_branch
          %186 = sbr.rel (%p184) target = $region36
        $region35: #{tpu_custom_call.1} parent=31 // pred_region
          %s187 = sand.u32 %s27, 1
          %s188 = scalar_lea.sflag [#allocation3], %s187
          %s189 = sand.u32 %s27, 1
          %s190 = smul.addr %s189, 8
          %s191 = scalar_lea.vmem [#allocation2], %s190
          %s193 = ssub.s32 128, 128
          %194 = vsyncadd %s188, %s193
          %s195 = smul.addr %s17, 2
          %s196 = smul.addr %s195, 64
          %s197 = scalar_lea.hbm %s0, %s196
          %s199 = sshll.u32 %s191, 4
          %s200 = int_to_ptr.vmem [resolvable:$true] %s199
          %202 = dma.hbm_to_vmem [thread:$0]  %s197, 128, %s200, %s188
        $region36: #{tpu_custom_call.1} parent=31 // pred_fallthru
          _
      $region32: #{tpu_custom_call.1} parent=5 // pred_fallthru
        _
      %p203 = scmp.le.s32.totalorder 1, %s17
      %p204 = scmp.lt.s32.totalorder %s17, 3
      %p205 = pnand %p203, %p204
      %p206 = pneg %p205
      // Predicated region
      $region37: #{tpu_custom_call.1} parent=5 // pred_check
        _
      $region38: #{tpu_custom_call.1} parent=5 // pred_check_branch
        %208 = sbr.rel (%p205) target = $region40
      $region39: #{tpu_custom_call.1} parent=5 // pred_region
        %s209 = ssub.s32 %s17, 1
        %s210 = sand.u32 %s30, 1
        %s211 = scalar_lea.sflag [#allocation3], %s210
        %s212 = sand.u32 %s30, 1
        %s213 = smul.addr %s212, 8
        %s214 = scalar_lea.vmem [#allocation2], %s213
        // Predicated region
        $region41: #{tpu_custom_call.1} parent=39 // pred_check
          %p215 = pneg %p43
        $region42: #{tpu_custom_call.1} parent=39 // pred_check_branch
          %217 = sbr.rel (%p215) target = $region44
        $region43: #{tpu_custom_call.1} parent=39 // pred_region
          %218 = dma.done %s211, 128
        $region44: #{tpu_custom_call.1} parent=39 // pred_fallthru
          _
        %s219 = sand.u32 %s30, 1
        %s220 = scalar_lea.sflag [#allocation3], %s219
        %s221 = sand.u32 %s30, 1
        %s222 = smul.addr %s221, 8
        %s223 = scalar_lea.vmem [#allocation2], %s222
        %p224 = pneg %p43
        %p225 = pneg %p40
        %p226 = pneg %p64
        %p227 = pneg %p61
        %p228 = pneg %p85
        %p229 = pneg %p82
        %p230 = pneg %p106
        %p231 = pneg %p103
        %p232 = pneg %p127
        %p233 = pneg %p124
        %p234 = pneg %p153
        %p235 = pneg %p150
        %s236 = sand.u32 %s140, 1
        %s237 = scalar_lea.sflag [#allocation4], %s236
        %s238 = sand.u32 %s140, 1
        %s239 = smul.addr %s238, 8
        %s240 = scalar_lea.vmem [#allocation5], %s239
        %v241 = vld [vmem:[%s214] sm:$0xff]
        %v242 = vld [vmem:[%s1] sm:$0x3]
        %v244 = vlaneseq
        %v245 = vshrl.u32 %v244, 7
        %v246 = vsub.s32 0, %v245
        %v247 = vrot.slane %v242, %v246
        %v248 = vlaneseq
        %v249 = vshrl.u32 %v248, 7
        %v250 = vsub.s32 1, %v249
        %v251 = vrot.slane %v242, %v250
        %v252 = vcombine.low %v247, %v251
        %v254 = vmul.f32 %v241, %v252
        %v256 = vcombine.high %v254, %v254
        %vm258 = vcmask 1043456
        %v259 = vsel %vm258, %v254, 0.0
        %v260 = vsel %vm258, %v256, 0.0
        %v261 = vadd.f32 %v259, %v260
        %262 = vadd.xlane.f32.xlu0 %v261
        %v263 = vpop.xlane.xlu0 %262
        %v264 = vld [vmem:[%s2] sm:$0xf]
        %v265 = vadd.f32 %v263, %v264
        %v266 = vxor.u32 %v265, 2147483648
        %v267 = vmul.f32 %v266, 1.442695
        %v268 = vpow.pop %v267
        %v269 = vadd.f32 %v268, 1.0
        %v270 = vrcp.pop %v269
        %v271 = vmul.f32 1.0, %v270
        %v272 = vld [vmem:[%s3] sm:$0xf]
        %274 = vset.pattern.permute.xlu0 0
        %275 = vperm.xlu0 %274, %v272
        %v276 = vpop.permute.xlu0 %275
        %v278 = vunpack.c.l.s4 839922192
        %v279 = vunpack.c.0.s8 %v278
        %v280 = vlaneseq
        %v281 = vshrl.u32 %v280, 7
        %v282 = vsub.s32 %v279, %v281
        %v283 = vrot.slane %v276, %v282
        %v285 = vmul.f32 %v241, %v283
        %v287 = vcombine.high %v285, %v285
        %v289 = vsel %vm258, %v285, 0.0
        %v290 = vrot.slane %v289, 4
        %v291 = vadd.f32 %v289, %v290
        %v292 = vrot.slane %v291, 2
        %v293 = vadd.f32 %v291, %v292
        %v294 = vrot.slane %v293, 1
        %v295 = vadd.f32 %v293, %v294
        %v296 = vsel %vm258, %v287, 0.0
        %v297 = vrot.slane %v296, 4
        %v298 = vadd.f32 %v296, %v297
        %v299 = vrot.slane %v298, 2
        %v300 = vadd.f32 %v298, %v299
        %v301 = vrot.slane %v300, 1
        %v302 = vadd.f32 %v300, %v301
        %v303 = vld [vmem:[%s4] sm:$0x3]
        %v305 = vlaneseq
        %v306 = vshrl.u32 %v305, 7
        %v307 = vsub.s32 0, %v306
        %v308 = vrot.slane %v303, %v307
        %v309 = vlaneseq
        %v310 = vshrl.u32 %v309, 7
        %v311 = vsub.s32 1, %v310
        %v312 = vrot.slane %v303, %v311
        %v315 = vadd.f32 %v295, %v308
        %v316 = vadd.f32 %v302, %v312
        %v317 = vxor.u32 %v315, 2147483648
        %v318 = vxor.u32 %v316, 2147483648
        %v319 = vmul.f32 %v317, 1.442695
        %v320 = vpow.pop %v319
        %v321 = vmul.f32 %v318, 1.442695
        %v322 = vpow.pop %v321
        %v323 = vadd.f32 %v320, 1.0
        %v324 = vadd.f32 %v322, 1.0
        %v325 = vrcp.pop %v323
        %v326 = vmul.f32 1.0, %v325
        %v327 = vrcp.pop %v324
        %v328 = vmul.f32 1.0, %v327
        %330 = vset.pattern.permute.xlu0 0
        %331 = vperm.xlu0 %330, %v271
        %v332 = vpop.permute.xlu0 %331
        %v334 = vlaneseq
        %v335 = vshrl.u32 %v334, 7
        %v336 = vsub.s32 0, %v335
        %v337 = vrot.slane %v326, %v336
        %v338 = vlaneseq
        %v339 = vshrl.u32 %v338, 7
        %v340 = vsub.s32 0, %v339
        %v341 = vrot.slane %v328, %v340
        %v342 = vadd.f32 %v332, %v337
        %v343 = vadd.f32 %v332, %v341
        %v346 = vcombine.low %v342, %v343
        %v348 = vmul.f32 %v241, %v346
        %349 = vst [vmem:[%s240] sm:$0xff] %v348
        %s350 = sand.u32 %s140, 1
        %s351 = scalar_lea.sflag [#allocation4], %s350
        %s352 = sand.u32 %s140, 1
        %s353 = smul.addr %s352, 8
        %s354 = scalar_lea.vmem [#allocation5], %s353
        // Predicated region
        $region45: #{tpu_custom_call.1} parent=39 // pred_check
          %p355 = pneg %p150
        $region46: #{tpu_custom_call.1} parent=39 // pred_check_branch
          %357 = sbr.rel (%p355) target = $region48
        $region47: #{tpu_custom_call.1} parent=39 // pred_region
          %s359 = ssub.s32 128, 128
          %360 = vsyncadd %s351, %s359
          %s361 = smul.addr %s22, 2
          %s362 = smul.addr %s361, 64
          %s363 = scalar_lea.hbm %s5, %s362
          %s365 = sshll.u32 %s354, 4
          %s366 = int_to_ptr.vmem [resolvable:$true] %s365
          %368 = dma.vmem_to_hbm [thread:$0]  %s366, 128, %s363, %s351
        $region48: #{tpu_custom_call.1} parent=39 // pred_fallthru
          _
      $region40: #{tpu_custom_call.1} parent=5 // pred_fallthru
        _
      %p369 = scmp.le.s32.totalorder 2, %s17
      // Predicated region
      $region49: #{tpu_custom_call.1} parent=5 // pred_check
        %p370 = pneg %p369
      $region50: #{tpu_custom_call.1} parent=5 // pred_check_branch
        %372 = sbr.rel (%p370) target = $region52
      $region51: #{tpu_custom_call.1} parent=5 // pred_region
        %s373 = ssub.s32 %s17, 2
        // Predicated region
        $region53: #{tpu_custom_call.1} parent=51 // pred_check
          %p374 = pneg %p156
        $region54: #{tpu_custom_call.1} parent=51 // pred_check_branch
          %376 = sbr.rel (%p374) target = $region56
        $region55: #{tpu_custom_call.1} parent=51 // pred_region
          %s377 = sand.u32 %s141, 1
          %s378 = scalar_lea.sflag [#allocation4], %s377
          %s379 = sand.u32 %s141, 1
          %s380 = smul.addr %s379, 8
          %s381 = scalar_lea.vmem [#allocation5], %s380
          %382 = dma.done %s378, 128
        $region56: #{tpu_custom_call.1} parent=51 // pred_fallthru
          _
      $region52: #{tpu_custom_call.1} parent=5 // pred_fallthru
        _
    $region6: #{tpu_custom_call.1} parent=1 // loop_footer
      %s21 = sadd.s32 1, %s17
    $region7: #{tpu_custom_call.1} parent=1 // loop_footer_branch
      %16 = sbr.rel target = $region3
    $region8: #{tpu_custom_call.1} parent=1 // loop_exit
      _
    %383 = vsyncpa [#allocation3], 1
    %s384 = scalar_lea.sflag [#allocation3], 1
    %385 = vsyncpa %s384, 1
    %386 = vsyncpa [#allocation4], 1
    %s387 = scalar_lea.sflag [#allocation4], 1
    %388 = vsyncpa %s387, 1

</llo_original>
